<compile_context>
chip_gen: v7x
topology: tpu7x:2x2x1
jax: 0.10.0
libtpu: 0.0.40
codegen_flags: <defaults>
</compile_context>

<pallas_src>
import jax
import jax.numpy as jnp
from jax.experimental import pallas as pl
from jax.experimental.pallas import tpu as pltpu


def _round_up(n, m):
    return -(-n // m) * m


def _head_kernel(x_ref, w_ref, b_ref, o_ref):
    # x_ref : [B, TK, HW]  feature-map channel chunk (NCHW with spatial flattened)
    # w_ref : [NC, TK]     combined (fc @ added_fc)^T weight chunk, pooling scale folded in
    # b_ref : [1, NC]      combined bias
    # o_ref : [B, NC]      logits, resident across the channel-reduction grid axis
    k = pl.program_id(0)

    @pl.when(k == 0)
    def _():
        o_ref[...] = jnp.broadcast_to(b_ref[...], o_ref.shape)

    # Global average pool: lane (XLU) sum; the 1/HW scale lives in w_ref.
    pooled = jnp.sum(x_ref[...].astype(jnp.float32), axis=-1)          # [B, TK]

    # Fused (fc -> dropout(eval)=identity -> added_fc) contraction for this chunk:
    # pooled [B, TK] x w^T [NC, TK] -> [B, NC]  (rhs-transposed MXU matmul).
    o_ref[...] += jax.lax.dot_general(
        pooled, w_ref[...],
        dimension_numbers=(((1,), (1,)), ((), ())),
        preferred_element_type=jnp.float32)


def prepare_resnet_head_params(w_cls, b_cls, w_fc, b_fc, spatial_size):
    """One-time (model init) weight prep; NOT in the per-call hot path.

    w_cls/b_cls: backbone fc (C -> 1000); w_fc/b_fc: added_fc (1000 -> num_classes),
    all with [in_features, out_features] layout.  spatial_size = H*W of the final
    feature map (the folded pooling scale ties the prepared weights to one input
    resolution).  Eval-mode fold (dropout = identity):
        logits = (mean_hw(x) @ w_cls + b_cls) @ w_fc + b_fc
               = sum_hw(x) @ [(w_cls @ w_fc) / HW] + (b_cls @ w_fc + b_fc).
    Returns (w_comb_t [num_classes, C] f32, b_comb [1, num_classes] f32).
    """
    hi = jax.lax.Precision.HIGHEST
    w_cls = w_cls.astype(jnp.float32)
    w_fc = w_fc.astype(jnp.float32)
    w_comb_t = jnp.dot(w_fc.T, w_cls.T, precision=hi) / float(spatial_size)   # [NC, C]
    b_comb = (jnp.dot(b_cls.reshape(1, -1).astype(jnp.float32), w_fc, precision=hi)
              + b_fc.reshape(1, -1).astype(jnp.float32))                       # [1, NC]
    return w_comb_t, b_comb


def resnet_based_head(x_nchw, w_comb_t, b_comb, *, vmem_budget_bytes=8 * 1024 * 1024):
    """x_nchw: [B, C, H, W] backbone final feature map (any float dtype; bf16 halves
    the dominant HBM stream).  w_comb_t/b_comb: from prepare_resnet_head_params()."""
    B, C, H, W = x_nchw.shape
    HW = H * W
    NC = w_comb_t.shape[0]

    # [B, C, HW]: free reshape (no NCHW->NHWC transpose materialized in HBM).
    x = x_nchw.reshape(B, C, HW)

    # Channel-tile size: whole reduction in one grid step when the double-buffered
    # x tile fits the (v5e-safe) VMEM budget — always true at real ResNet shapes.
    # Otherwise fall back to a 128-multiple K tile with output-resident accumulation.
    lane_hw = _round_up(HW, 128)                      # HW pads to 128 lanes in VMEM
    per_ch_bytes = B * lane_hw * x.dtype.itemsize     # one channel, one buffer
    if 2 * C * per_ch_bytes <= vmem_budget_bytes:
        tk, c_pad = C, C
    else:
        tk = max(128, (vmem_budget_bytes // (2 * per_ch_bytes)) // 128 * 128)
        c_pad = _round_up(C, tk)
    num_k = c_pad // tk

    w = w_comb_t.astype(jnp.float32)
    b = b_comb.astype(jnp.float32)
    if c_pad != C:
        # TODO(synk): this per-call jnp.pad of the feature map materializes an HBM
        #             copy; it only triggers when C exceeds the VMEM budget (never
        #             for ResNet-18..152 final feature maps).
        x = jnp.pad(x, ((0, 0), (0, c_pad - C), (0, 0)))
        w = jnp.pad(w, ((0, 0), (0, c_pad - C)))

    flops = B * c_pad * HW + 2 * B * c_pad * NC
    bytes_accessed = (x.size * x.dtype.itemsize + w.size * 4 + b.size * 4 + B * NC * 4)

    return pl.pallas_call(
        _head_kernel,
        out_shape=jax.ShapeDtypeStruct((B, NC), jnp.float32),
        grid=(num_k,),
        in_specs=[
            pl.BlockSpec((B, tk, HW), lambda k: (0, k, 0)),    # feature-map channel chunk
            pl.BlockSpec((NC, tk), lambda k: (0, k)),          # combined weight chunk (transposed)
            pl.BlockSpec((1, NC), lambda k: (0, 0)),           # combined bias
        ],
        out_specs=pl.BlockSpec((B, NC), lambda k: (0, 0)),     # resident across the K reduction
        compiler_params=pltpu.CompilerParams(
            dimension_semantics=("arbitrary",)),               # K is a reduction axis
        cost_estimate=pl.CostEstimate(
            flops=flops, transcendentals=0, bytes_accessed=bytes_accessed),
    )(x, w, b)


def _reference(x_nchw, w_cls, b_cls, w_fc, b_fc):
    hi = jax.lax.Precision.HIGHEST
    feat = jnp.mean(x_nchw.astype(jnp.float32), axis=(2, 3))           # global avg pool -> [B, C]
    h = jnp.dot(feat, w_cls.astype(jnp.float32), precision=hi) + b_cls.reshape(1, -1)
    # F.dropout(net, drop_p, self.training): eval mode -> identity.
    return jnp.dot(h, w_fc.astype(jnp.float32), precision=hi) + b_fc.reshape(1, -1)


if __name__ == "__main__":
    # Small shapes (real ResNet-50 final feature map: [B, 2048, 7, 7] for 224x224 inputs).
    B, C, H, W = 2, 256, 4, 4
    hidden = 1000          # backbone fc output width (fixed ImageNet head)
    num_classes = 3

    key = jax.random.PRNGKey(0)
    kx, k1, k2, k3, k4 = jax.random.split(key, 5)

    # Deterministic synthetic parameters (no checkpoint load).
    x = jax.random.normal(kx, (B, C, H, W), dtype=jnp.float32)
    w_cls = jax.random.normal(k1, (C, hidden), dtype=jnp.float32) * 0.02
    b_cls = jax.random.normal(k2, (1, hidden), dtype=jnp.float32) * 0.01
    w_fc = jax.random.normal(k3, (hidden, num_classes), dtype=jnp.float32) * 0.02
    b_fc = jax.random.normal(k4, (1, num_classes), dtype=jnp.float32) * 0.01

    # One-time weight prep (hoisted out of the per-call path).
    w_comb_t, b_comb = jax.block_until_ready(
        prepare_resnet_head_params(w_cls, b_cls, w_fc, b_fc, H * W))

    out = resnet_based_head(x, w_comb_t, b_comb)
    out = jax.block_until_ready(out)

    ref = _reference(x, w_cls, b_cls, w_fc, b_fc)
    assert out.shape == (B, num_classes), out.shape
    # Tolerance covers MXU rounding of the fused single matmul vs. the two
    # HIGHEST-precision reference matmuls.
    assert jnp.allclose(out, ref, atol=2e-3, rtol=2e-3), (out, ref)

    print("KERNEL_OK")
</pallas_src>

<mosaic_0001>
module attributes {stable_mosaic.version = 11 : i64} {
  func.func @_head_kernel(%arg0: i32, %arg1: memref<2x256x16xf32, #tpu.memory_space<vmem>>, %arg2: memref<3x256xf32, #tpu.memory_space<vmem>>, %arg3: memref<1x3xf32, #tpu.memory_space<vmem>>, %arg4: memref<2x3xf32, #tpu.memory_space<vmem>>) attributes {dimension_semantics = [#tpu.dimension_semantics<arbitrary>], iteration_bounds = array<i64: 1>, scalar_prefetch = 0 : i64, scratch_operands = 0 : i64, tpu.core_type = #tpu.core_type<tc>, window_params = [{transform_indices = @transform_0, window_bounds = array<i64: 2, 256, 16>}, {transform_indices = @transform_1, window_bounds = array<i64: 3, 256>}, {pipeline_mode = #tpu.pipeline_mode<synchronous>, transform_indices = @transform_2, window_bounds = array<i64: 1, 3>}, {pipeline_mode = #tpu.pipeline_mode<synchronous>, transform_indices = @transform_3, window_bounds = array<i64: 2, 3>}]} {
    %c0_i32 = arith.constant 0 : i32
    %0 = arith.cmpi eq, %arg0, %c0_i32 : i32
    %1 = arith.extui %0 : i1 to i32
    %c0_i32_0 = arith.constant 0 : i32
    %2 = arith.cmpi ne, %1, %c0_i32_0 : i32
    scf.if %2 {
      %c0_10 = arith.constant 0 : index
      %c0_11 = arith.constant 0 : index
      %10 = vector.load %arg3[%c0_10, %c0_11] : memref<1x3xf32, #tpu.memory_space<vmem>>, vector<1x3xf32>
      %11 = vector.shape_cast %10 : vector<1x3xf32> to vector<1x3xf32>
      %12 = vector.broadcast %11 : vector<1x3xf32> to vector<2x3xf32>
      %c0_12 = arith.constant 0 : index
      %c0_13 = arith.constant 0 : index
      %13 = vector.load %arg4[%c0_12, %c0_13] : memref<2x3xf32, #tpu.memory_space<vmem>>, vector<2x3xf32>
      tpu.vector_store %arg4[%c0_12, %c0_13], %12 {strides = array<i32>} : memref<2x3xf32, #tpu.memory_space<vmem>>, vector<2x3xf32>,
    } else {
    }
    %c0 = arith.constant 0 : index
    %c0_1 = arith.constant 0 : index
    %c0_2 = arith.constant 0 : index
    %3 = vector.load %arg1[%c0, %c0_1, %c0_2] : memref<2x256x16xf32, #tpu.memory_space<vmem>>, vector<2x256x16xf32>
    %cst = arith.constant dense<0.000000e+00> : vector<2x256xf32>
    %4 = vector.multi_reduction <add>, %3, %cst [2] : vector<2x256x16xf32> to vector<2x256xf32>
    %c0_3 = arith.constant 0 : index
    %c0_4 = arith.constant 0 : index
    %5 = vector.load %arg4[%c0_3, %c0_4] : memref<2x3xf32, #tpu.memory_space<vmem>>, vector<2x3xf32>
    %c0_5 = arith.constant 0 : index
    %c0_6 = arith.constant 0 : index
    %6 = vector.load %arg2[%c0_5, %c0_6] : memref<3x256xf32, #tpu.memory_space<vmem>>, vector<3x256xf32>
    %cst_7 = arith.constant dense<0.000000e+00> : vector<2x3xf32>
    %7 = tpu.matmul %4, %6, %cst_7 {dimension_numbers = #tpu.dot_dimension_numbers<[1], [1], [0], [0], [0, 0, 1, 0], [], []>} : vector<2x256xf32>, vector<3x256xf32>, vector<2x3xf32> -> vector<2x3xf32>
    %8 = arith.addf %5, %7 : vector<2x3xf32>
    %c0_8 = arith.constant 0 : index
    %c0_9 = arith.constant 0 : index
    %9 = vector.load %arg4[%c0_8, %c0_9] : memref<2x3xf32, #tpu.memory_space<vmem>>, vector<2x3xf32>
    tpu.vector_store %arg4[%c0_8, %c0_9], %8 {strides = array<i32>} : memref<2x3xf32, #tpu.memory_space<vmem>>, vector<2x3xf32>,
    return
  }
  func.func @transform_0(%arg0: i32) -> (i32, i32, i32) {
    %c0_i32 = arith.constant 0 : i32
    %c0_i32_0 = arith.constant 0 : i32
    %c0_i32_1 = arith.constant 0 : i32
    return %c0_i32, %arg0, %c0_i32_0 : i32, i32, i32
  }
  func.func @transform_1(%arg0: i32) -> (i32, i32) {
    %c0_i32 = arith.constant 0 : i32
    %c0_i32_0 = arith.constant 0 : i32
    return %c0_i32, %arg0 : i32, i32
  }
  func.func @transform_2(%arg0: i32) -> (i32, i32) {
    %c0_i32 = arith.constant 0 : i32
    %c0_i32_0 = arith.constant 0 : i32
    %c0_i32_1 = arith.constant 0 : i32
    return %c0_i32, %c0_i32_0 : i32, i32
  }
  func.func @transform_3(%arg0: i32) -> (i32, i32) {
    %c0_i32 = arith.constant 0 : i32
    %c0_i32_0 = arith.constant 0 : i32
    %c0_i32_1 = arith.constant 0 : i32
    return %c0_i32, %c0_i32_0 : i32, i32
  }
}

</mosaic_0001>

<llo_original>
// kernel: tpu_custom_call.1
$region0: #{tpu_custom_call.1}
  #allocation0 [shape = 'u32[]', space=smem, size = 0x4, offset = 0x4, fixed_abs, tag = 'smem constant byte address 0x4 - core index']
  #allocation1 [shape = 'u32[144,128]{1,0:T(1,128)}', space=vmem, size = 0x12000, scoped, tag = 'internal scratch']
  %s0 = inlined_call_operand.vmem [shape: f32[2,256,16], index: 0, kind: input, shape index: {}]
  %s1 = inlined_call_operand.vmem [shape: f32[3,256], index: 1, kind: input, shape index: {}]
  %s2 = inlined_call_operand.vmem [shape: f32[1,3], index: 2, kind: input, shape index: {}]
  %s3 = inlined_call_operand.hbm [shape: f32[2,3], index: 3, kind: output, shape index: {}]
  %s4 = sld [smem:[#allocation0]]
  $region26: #{tpu_custom_call.1} parent=0
    _
  %s6 = ssub.s32 1, %s4
  %s7 = scalar_select 0, %s6, %s4
  $region1: #{tpu_custom_call.1} parent=0
    #allocation2 [shape = 'u8[1024]{0}', space=vmem, size = 0x400, scoped, tag = 'output window, operand 0, single buffered']
    #allocation3 [shape = 's32[1]{0}', space=sflag, size = 0x4, scoped, tag = 'scoped memory for tpu_custom_call.1']
    %8 = vsyncpa [#allocation3], 0
    // Predicated region
    $region2: #{tpu_custom_call.1} parent=1 // pred_check
      _
    $region3: #{tpu_custom_call.1} parent=1 // pred_check_branch
      %10 = sbr.rel (0) target = $region5
    $region4: #{tpu_custom_call.1} parent=1 // pred_region
      _
    $region5: #{tpu_custom_call.1} parent=1 // pred_fallthru
      _
    // Predicated region
    $region6: #{tpu_custom_call.1} parent=1 // pred_check
      _
    $region7: #{tpu_custom_call.1} parent=1 // pred_check_branch
      %12 = sbr.rel (0) target = $region9
    $region8: #{tpu_custom_call.1} parent=1 // pred_region
      _
    $region9: #{tpu_custom_call.1} parent=1 // pred_fallthru
      _
    // Predicated region
    $region10: #{tpu_custom_call.1} parent=1 // pred_check
      _
    $region11: #{tpu_custom_call.1} parent=1 // pred_check_branch
      %14 = sbr.rel (0) target = $region13
    $region12: #{tpu_custom_call.1} parent=1 // pred_region
      _
    $region13: #{tpu_custom_call.1} parent=1 // pred_fallthru
      _
    %p15 = scmp.eq.s32.totalorder 0, 0
    // Predicated region
    $region14: #{tpu_custom_call.1} parent=1 // pred_check
      %p16 = pneg %p15
    $region15: #{tpu_custom_call.1} parent=1 // pred_check_branch
      %18 = sbr.rel (%p16) target = $region17
    $region16: #{tpu_custom_call.1} parent=1 // pred_region
      %v19 = vld [vmem:[%s2] sm:$0x1]
      %v21 = vlaneseq
      %v22 = vshrl.u32 %v21, 7
      %v23 = vsub.s32 0, %v22
      %v24 = vrot.slane %v19, %v23
      %vm26 = vcmask 17408
      %27 = vst.msk [vmem:[#allocation2] sm:$0x3] %vm26, %v24
    $region17: #{tpu_custom_call.1} parent=1 // pred_fallthru
      _
    %v28 = vld [vmem:[%s0] sm:$0xff]
    %v29 = vld [vmem:[%s0 + $0x8] sm:$0xff]
    %v30 = vld [vmem:[%s0 + $0x10] sm:$0xff]
    %v31 = vld [vmem:[%s0 + $0x18] sm:$0xff]
    %v32 = vld [vmem:[%s0 + $0x20] sm:$0xff]
    %v33 = vld [vmem:[%s0 + $0x28] sm:$0xff]
    %v34 = vld [vmem:[%s0 + $0x30] sm:$0xff]
    %v35 = vld [vmem:[%s0 + $0x38] sm:$0xff]
    %v36 = vld [vmem:[%s0 + $0x40] sm:$0xff]
    %v37 = vld [vmem:[%s0 + $0x48] sm:$0xff]
    %v38 = vld [vmem:[%s0 + $0x50] sm:$0xff]
    %v39 = vld [vmem:[%s0 + $0x58] sm:$0xff]
    %v40 = vld [vmem:[%s0 + $0x60] sm:$0xff]
    %v41 = vld [vmem:[%s0 + $0x68] sm:$0xff]
    %v42 = vld [vmem:[%s0 + $0x70] sm:$0xff]
    %v43 = vld [vmem:[%s0 + $0x78] sm:$0xff]
    %v44 = vld [vmem:[%s0 + $0x80] sm:$0xff]
    %v45 = vld [vmem:[%s0 + $0x88] sm:$0xff]
    %v46 = vld [vmem:[%s0 + $0x90] sm:$0xff]
    %v47 = vld [vmem:[%s0 + $0x98] sm:$0xff]
    %v48 = vld [vmem:[%s0 + $0xa0] sm:$0xff]
    %v49 = vld [vmem:[%s0 + $0xa8] sm:$0xff]
    %v50 = vld [vmem:[%s0 + $0xb0] sm:$0xff]
    %v51 = vld [vmem:[%s0 + $0xb8] sm:$0xff]
    %v52 = vld [vmem:[%s0 + $0xc0] sm:$0xff]
    %v53 = vld [vmem:[%s0 + $0xc8] sm:$0xff]
    %v54 = vld [vmem:[%s0 + $0xd0] sm:$0xff]
    %v55 = vld [vmem:[%s0 + $0xd8] sm:$0xff]
    %v56 = vld [vmem:[%s0 + $0xe0] sm:$0xff]
    %v57 = vld [vmem:[%s0 + $0xe8] sm:$0xff]
    %v58 = vld [vmem:[%s0 + $0xf0] sm:$0xff]
    %v59 = vld [vmem:[%s0 + $0xf8] sm:$0xff]
    %v60 = vld [vmem:[%s0 + $0x100] sm:$0xff]
    %v61 = vld [vmem:[%s0 + $0x108] sm:$0xff]
    %v62 = vld [vmem:[%s0 + $0x110] sm:$0xff]
    %v63 = vld [vmem:[%s0 + $0x118] sm:$0xff]
    %v64 = vld [vmem:[%s0 + $0x120] sm:$0xff]
    %v65 = vld [vmem:[%s0 + $0x128] sm:$0xff]
    %v66 = vld [vmem:[%s0 + $0x130] sm:$0xff]
    %v67 = vld [vmem:[%s0 + $0x138] sm:$0xff]
    %v68 = vld [vmem:[%s0 + $0x140] sm:$0xff]
    %v69 = vld [vmem:[%s0 + $0x148] sm:$0xff]
    %v70 = vld [vmem:[%s0 + $0x150] sm:$0xff]
    %v71 = vld [vmem:[%s0 + $0x158] sm:$0xff]
    %v72 = vld [vmem:[%s0 + $0x160] sm:$0xff]
    %v73 = vld [vmem:[%s0 + $0x168] sm:$0xff]
    %v74 = vld [vmem:[%s0 + $0x170] sm:$0xff]
    %v75 = vld [vmem:[%s0 + $0x178] sm:$0xff]
    %v76 = vld [vmem:[%s0 + $0x180] sm:$0xff]
    %v77 = vld [vmem:[%s0 + $0x188] sm:$0xff]
    %v78 = vld [vmem:[%s0 + $0x190] sm:$0xff]
    %v79 = vld [vmem:[%s0 + $0x198] sm:$0xff]
    %v80 = vld [vmem:[%s0 + $0x1a0] sm:$0xff]
    %v81 = vld [vmem:[%s0 + $0x1a8] sm:$0xff]
    %v82 = vld [vmem:[%s0 + $0x1b0] sm:$0xff]
    %v83 = vld [vmem:[%s0 + $0x1b8] sm:$0xff]
    %v84 = vld [vmem:[%s0 + $0x1c0] sm:$0xff]
    %v85 = vld [vmem:[%s0 + $0x1c8] sm:$0xff]
    %v86 = vld [vmem:[%s0 + $0x1d0] sm:$0xff]
    %v87 = vld [vmem:[%s0 + $0x1d8] sm:$0xff]
    %v88 = vld [vmem:[%s0 + $0x1e0] sm:$0xff]
    %v89 = vld [vmem:[%s0 + $0x1e8] sm:$0xff]
    %v90 = vld [vmem:[%s0 + $0x1f0] sm:$0xff]
    %v91 = vld [vmem:[%s0 + $0x1f8] sm:$0xff]
    %vm92 = vcmask 130048
    %v93 = vsel %vm92, %v28, 0.0
    %94 = vadd.xlane.f32.xlu0 %v93
    %v95 = vpop.xlane.xlu0 %94
    %v96 = vsel %vm92, %v29, 0.0
    %97 = vadd.xlane.f32.xlu0 %v96
    %v98 = vpop.xlane.xlu0 %97
    %v99 = vsel %vm92, %v30, 0.0
    %100 = vadd.xlane.f32.xlu0 %v99
    %v101 = vpop.xlane.xlu0 %100
    %v102 = vsel %vm92, %v31, 0.0
    %103 = vadd.xlane.f32.xlu0 %v102
    %v104 = vpop.xlane.xlu0 %103
    %v105 = vsel %vm92, %v32, 0.0
    %106 = vadd.xlane.f32.xlu0 %v105
    %v107 = vpop.xlane.xlu0 %106
    %v108 = vsel %vm92, %v33, 0.0
    %109 = vadd.xlane.f32.xlu0 %v108
    %v110 = vpop.xlane.xlu0 %109
    %v111 = vsel %vm92, %v34, 0.0
    %112 = vadd.xlane.f32.xlu0 %v111
    %v113 = vpop.xlane.xlu0 %112
    %v114 = vsel %vm92, %v35, 0.0
    %115 = vadd.xlane.f32.xlu0 %v114
    %v116 = vpop.xlane.xlu0 %115
    %v117 = vsel %vm92, %v36, 0.0
    %118 = vadd.xlane.f32.xlu0 %v117
    %v119 = vpop.xlane.xlu0 %118
    %v120 = vsel %vm92, %v37, 0.0
    %121 = vadd.xlane.f32.xlu0 %v120
    %v122 = vpop.xlane.xlu0 %121
    %v123 = vsel %vm92, %v38, 0.0
    %124 = vadd.xlane.f32.xlu0 %v123
    %v125 = vpop.xlane.xlu0 %124
    %v126 = vsel %vm92, %v39, 0.0
    %127 = vadd.xlane.f32.xlu0 %v126
    %v128 = vpop.xlane.xlu0 %127
    %v129 = vsel %vm92, %v40, 0.0
    %130 = vadd.xlane.f32.xlu0 %v129
    %v131 = vpop.xlane.xlu0 %130
    %v132 = vsel %vm92, %v41, 0.0
    %133 = vadd.xlane.f32.xlu0 %v132
    %v134 = vpop.xlane.xlu0 %133
    %v135 = vsel %vm92, %v42, 0.0
    %136 = vadd.xlane.f32.xlu0 %v135
    %v137 = vpop.xlane.xlu0 %136
    %v138 = vsel %vm92, %v43, 0.0
    %139 = vadd.xlane.f32.xlu0 %v138
    %v140 = vpop.xlane.xlu0 %139
    %v141 = vsel %vm92, %v44, 0.0
    %142 = vadd.xlane.f32.xlu0 %v141
    %v143 = vpop.xlane.xlu0 %142
    %v144 = vsel %vm92, %v45, 0.0
    %145 = vadd.xlane.f32.xlu0 %v144
    %v146 = vpop.xlane.xlu0 %145
    %v147 = vsel %vm92, %v46, 0.0
    %148 = vadd.xlane.f32.xlu0 %v147
    %v149 = vpop.xlane.xlu0 %148
    %v150 = vsel %vm92, %v47, 0.0
    %151 = vadd.xlane.f32.xlu0 %v150
    %v152 = vpop.xlane.xlu0 %151
    %v153 = vsel %vm92, %v48, 0.0
    %154 = vadd.xlane.f32.xlu0 %v153
    %v155 = vpop.xlane.xlu0 %154
    %v156 = vsel %vm92, %v49, 0.0
    %157 = vadd.xlane.f32.xlu0 %v156
    %v158 = vpop.xlane.xlu0 %157
    %v159 = vsel %vm92, %v50, 0.0
    %160 = vadd.xlane.f32.xlu0 %v159
    %v161 = vpop.xlane.xlu0 %160
    %v162 = vsel %vm92, %v51, 0.0
    %163 = vadd.xlane.f32.xlu0 %v162
    %v164 = vpop.xlane.xlu0 %163
    %v165 = vsel %vm92, %v52, 0.0
    %166 = vadd.xlane.f32.xlu0 %v165
    %v167 = vpop.xlane.xlu0 %166
    %v168 = vsel %vm92, %v53, 0.0
    %169 = vadd.xlane.f32.xlu0 %v168
    %v170 = vpop.xlane.xlu0 %169
    %v171 = vsel %vm92, %v54, 0.0
    %172 = vadd.xlane.f32.xlu0 %v171
    %v173 = vpop.xlane.xlu0 %172
    %v174 = vsel %vm92, %v55, 0.0
    %175 = vadd.xlane.f32.xlu0 %v174
    %v176 = vpop.xlane.xlu0 %175
    %v177 = vsel %vm92, %v56, 0.0
    %178 = vadd.xlane.f32.xlu0 %v177
    %v179 = vpop.xlane.xlu0 %178
    %v180 = vsel %vm92, %v57, 0.0
    %181 = vadd.xlane.f32.xlu0 %v180
    %v182 = vpop.xlane.xlu0 %181
    %v183 = vsel %vm92, %v58, 0.0
    %184 = vadd.xlane.f32.xlu0 %v183
    %v185 = vpop.xlane.xlu0 %184
    %v186 = vsel %vm92, %v59, 0.0
    %187 = vadd.xlane.f32.xlu0 %v186
    %v188 = vpop.xlane.xlu0 %187
    %v189 = vsel %vm92, %v60, 0.0
    %190 = vadd.xlane.f32.xlu0 %v189
    %v191 = vpop.xlane.xlu0 %190
    %v192 = vsel %vm92, %v61, 0.0
    %193 = vadd.xlane.f32.xlu0 %v192
    %v194 = vpop.xlane.xlu0 %193
    %v195 = vsel %vm92, %v62, 0.0
    %196 = vadd.xlane.f32.xlu0 %v195
    %v197 = vpop.xlane.xlu0 %196
    %v198 = vsel %vm92, %v63, 0.0
    %199 = vadd.xlane.f32.xlu0 %v198
    %v200 = vpop.xlane.xlu0 %199
    %v201 = vsel %vm92, %v64, 0.0
    %202 = vadd.xlane.f32.xlu0 %v201
    %v203 = vpop.xlane.xlu0 %202
    %v204 = vsel %vm92, %v65, 0.0
    %205 = vadd.xlane.f32.xlu0 %v204
    %v206 = vpop.xlane.xlu0 %205
    %v207 = vsel %vm92, %v66, 0.0
    %208 = vadd.xlane.f32.xlu0 %v207
    %v209 = vpop.xlane.xlu0 %208
    %v210 = vsel %vm92, %v67, 0.0
    %211 = vadd.xlane.f32.xlu0 %v210
    %v212 = vpop.xlane.xlu0 %211
    %v213 = vsel %vm92, %v68, 0.0
    %214 = vadd.xlane.f32.xlu0 %v213
    %v215 = vpop.xlane.xlu0 %214
    %v216 = vsel %vm92, %v69, 0.0
    %217 = vadd.xlane.f32.xlu0 %v216
    %v218 = vpop.xlane.xlu0 %217
    %v219 = vsel %vm92, %v70, 0.0
    %220 = vadd.xlane.f32.xlu0 %v219
    %v221 = vpop.xlane.xlu0 %220
    %v222 = vsel %vm92, %v71, 0.0
    %223 = vadd.xlane.f32.xlu0 %v222
    %v224 = vpop.xlane.xlu0 %223
    %v225 = vsel %vm92, %v72, 0.0
    %226 = vadd.xlane.f32.xlu0 %v225
    %v227 = vpop.xlane.xlu0 %226
    %v228 = vsel %vm92, %v73, 0.0
    %229 = vadd.xlane.f32.xlu0 %v228
    %v230 = vpop.xlane.xlu0 %229
    %v231 = vsel %vm92, %v74, 0.0
    %232 = vadd.xlane.f32.xlu0 %v231
    %v233 = vpop.xlane.xlu0 %232
    %v234 = vsel %vm92, %v75, 0.0
    %235 = vadd.xlane.f32.xlu0 %v234
    %v236 = vpop.xlane.xlu0 %235
    %v237 = vsel %vm92, %v76, 0.0
    %238 = vadd.xlane.f32.xlu0 %v237
    %v239 = vpop.xlane.xlu0 %238
    %v240 = vsel %vm92, %v77, 0.0
    %241 = vadd.xlane.f32.xlu0 %v240
    %v242 = vpop.xlane.xlu0 %241
    %v243 = vsel %vm92, %v78, 0.0
    %244 = vadd.xlane.f32.xlu0 %v243
    %v245 = vpop.xlane.xlu0 %244
    %v246 = vsel %vm92, %v79, 0.0
    %247 = vadd.xlane.f32.xlu0 %v246
    %v248 = vpop.xlane.xlu0 %247
    %v249 = vsel %vm92, %v80, 0.0
    %250 = vadd.xlane.f32.xlu0 %v249
    %v251 = vpop.xlane.xlu0 %250
    %v252 = vsel %vm92, %v81, 0.0
    %253 = vadd.xlane.f32.xlu0 %v252
    %v254 = vpop.xlane.xlu0 %253
    %v255 = vsel %vm92, %v82, 0.0
    %256 = vadd.xlane.f32.xlu0 %v255
    %v257 = vpop.xlane.xlu0 %256
    %v258 = vsel %vm92, %v83, 0.0
    %259 = vadd.xlane.f32.xlu0 %v258
    %v260 = vpop.xlane.xlu0 %259
    %v261 = vsel %vm92, %v84, 0.0
    %262 = vadd.xlane.f32.xlu0 %v261
    %v263 = vpop.xlane.xlu0 %262
    %v264 = vsel %vm92, %v85, 0.0
    %265 = vadd.xlane.f32.xlu0 %v264
    %v266 = vpop.xlane.xlu0 %265
    %v267 = vsel %vm92, %v86, 0.0
    %268 = vadd.xlane.f32.xlu0 %v267
    %v269 = vpop.xlane.xlu0 %268
    %v270 = vsel %vm92, %v87, 0.0
    %271 = vadd.xlane.f32.xlu0 %v270
    %v272 = vpop.xlane.xlu0 %271
    %v273 = vsel %vm92, %v88, 0.0
    %274 = vadd.xlane.f32.xlu0 %v273
    %v275 = vpop.xlane.xlu0 %274
    %v276 = vsel %vm92, %v89, 0.0
    %277 = vadd.xlane.f32.xlu0 %v276
    %v278 = vpop.xlane.xlu0 %277
    %v279 = vsel %vm92, %v90, 0.0
    %280 = vadd.xlane.f32.xlu0 %v279
    %v281 = vpop.xlane.xlu0 %280
    %v282 = vsel %vm92, %v91, 0.0
    %283 = vadd.xlane.f32.xlu0 %v282
    %v284 = vpop.xlane.xlu0 %283
    %v285 = vld [vmem:[#allocation2] sm:$0x3]
    %v286 = vld [vmem:[%s1] sm:$0x77]
    %v351 = vlaneseq
    %v352 = vand.u32 %v351, 127
    %v353 = vlaneseq
    %v354 = vshrl.u32 %v353, 7
    %v355 = vsub.s32 %v352, %v354
    %v356 = vrot.slane %v95, %v355
    %v357 = vadd.s32 %v352, 4294967288
    %v358 = vlaneseq
    %v359 = vshrl.u32 %v358, 7
    %v360 = vsub.s32 %v357, %v359
    %v361 = vrot.slane %v98, %v360
    %vm362 = vcmask 130112
    %v363 = vsel %vm362, %v361, %v356
    %v364 = vadd.s32 %v352, 4294967280
    %v365 = vlaneseq
    %v366 = vshrl.u32 %v365, 7
    %v367 = vsub.s32 %v364, %v366
    %v368 = vrot.slane %v101, %v367
    %vm369 = vcmask 195712
    %v370 = vsel %vm369, %v368, %v363
    %v371 = vadd.s32 %v352, 4294967272
    %v372 = vlaneseq
    %v373 = vshrl.u32 %v372, 7
    %v374 = vsub.s32 %v371, %v373
    %v375 = vrot.slane %v104, %v374
    %vm376 = vcmask 261312
    %v377 = vsel %vm376, %v375, %v370
    %v378 = vadd.s32 %v352, 4294967264
    %v379 = vlaneseq
    %v380 = vshrl.u32 %v379, 7
    %v381 = vsub.s32 %v378, %v380
    %v382 = vrot.slane %v107, %v381
    %vm383 = vcmask 326912
    %v384 = vsel %vm383, %v382, %v377
    %v385 = vadd.s32 %v352, 4294967256
    %v386 = vlaneseq
    %v387 = vshrl.u32 %v386, 7
    %v388 = vsub.s32 %v385, %v387
    %v389 = vrot.slane %v110, %v388
    %vm390 = vcmask 392512
    %v391 = vsel %vm390, %v389, %v384
    %v392 = vadd.s32 %v352, 4294967248
    %v393 = vlaneseq
    %v394 = vshrl.u32 %v393, 7
    %v395 = vsub.s32 %v392, %v394
    %v396 = vrot.slane %v113, %v395
    %vm397 = vcmask 458112
    %v398 = vsel %vm397, %v396, %v391
    %v399 = vadd.s32 %v352, 4294967240
    %v400 = vlaneseq
    %v401 = vshrl.u32 %v400, 7
    %v402 = vsub.s32 %v399, %v401
    %v403 = vrot.slane %v116, %v402
    %vm404 = vcmask 523712
    %v405 = vsel %vm404, %v403, %v398
    %v406 = vadd.s32 %v352, 4294967232
    %v407 = vlaneseq
    %v408 = vshrl.u32 %v407, 7
    %v409 = vsub.s32 %v406, %v408
    %v410 = vrot.slane %v119, %v409
    %vm411 = vcmask 589312
    %v412 = vsel %vm411, %v410, %v405
    %v413 = vadd.s32 %v352, 4294967224
    %v414 = vlaneseq
    %v415 = vshrl.u32 %v414, 7
    %v416 = vsub.s32 %v413, %v415
    %v417 = vrot.slane %v122, %v416
    %vm418 = vcmask 654912
    %v419 = vsel %vm418, %v417, %v412
    %v420 = vadd.s32 %v352, 4294967216
    %v421 = vlaneseq
    %v422 = vshrl.u32 %v421, 7
    %v423 = vsub.s32 %v420, %v422
    %v424 = vrot.slane %v125, %v423
    %vm425 = vcmask 720512
    %v426 = vsel %vm425, %v424, %v419
    %v427 = vadd.s32 %v352, 4294967208
    %v428 = vlaneseq
    %v429 = vshrl.u32 %v428, 7
    %v430 = vsub.s32 %v427, %v429
    %v431 = vrot.slane %v128, %v430
    %vm432 = vcmask 786112
    %v433 = vsel %vm432, %v431, %v426
    %v434 = vadd.s32 %v352, 4294967200
    %v435 = vlaneseq
    %v436 = vshrl.u32 %v435, 7
    %v437 = vsub.s32 %v434, %v436
    %v438 = vrot.slane %v131, %v437
    %vm439 = vcmask 851712
    %v440 = vsel %vm439, %v438, %v433
    %v441 = vadd.s32 %v352, 4294967192
    %v442 = vlaneseq
    %v443 = vshrl.u32 %v442, 7
    %v444 = vsub.s32 %v441, %v443
    %v445 = vrot.slane %v134, %v444
    %vm446 = vcmask 917312
    %v447 = vsel %vm446, %v445, %v440
    %v448 = vadd.s32 %v352, 4294967184
    %v449 = vlaneseq
    %v450 = vshrl.u32 %v449, 7
    %v451 = vsub.s32 %v448, %v450
    %v452 = vrot.slane %v137, %v451
    %vm453 = vcmask 982912
    %v454 = vsel %vm453, %v452, %v447
    %v455 = vadd.s32 %v352, 4294967176
    %v456 = vlaneseq
    %v457 = vshrl.u32 %v456, 7
    %v458 = vsub.s32 %v455, %v457
    %v459 = vrot.slane %v140, %v458
    %vm460 = vcmask 1048512
    %v461 = vsel %vm460, %v459, %v454
    %v462 = vlaneseq
    %v463 = vshrl.u32 %v462, 7
    %v464 = vsub.s32 %v352, %v463
    %v465 = vrot.slane %v143, %v464
    %v466 = vlaneseq
    %v467 = vshrl.u32 %v466, 7
    %v468 = vsub.s32 %v357, %v467
    %v469 = vrot.slane %v146, %v468
    %v470 = vsel %vm362, %v469, %v465
    %v471 = vlaneseq
    %v472 = vshrl.u32 %v471, 7
    %v473 = vsub.s32 %v364, %v472
    %v474 = vrot.slane %v149, %v473
    %v475 = vsel %vm369, %v474, %v470
    %v476 = vlaneseq
    %v477 = vshrl.u32 %v476, 7
    %v478 = vsub.s32 %v371, %v477
    %v479 = vrot.slane %v152, %v478
    %v480 = vsel %vm376, %v479, %v475
    %v481 = vlaneseq
    %v482 = vshrl.u32 %v481, 7
    %v483 = vsub.s32 %v378, %v482
    %v484 = vrot.slane %v155, %v483
    %v485 = vsel %vm383, %v484, %v480
    %v486 = vlaneseq
    %v487 = vshrl.u32 %v486, 7
    %v488 = vsub.s32 %v385, %v487
    %v489 = vrot.slane %v158, %v488
    %v490 = vsel %vm390, %v489, %v485
    %v491 = vlaneseq
    %v492 = vshrl.u32 %v491, 7
    %v493 = vsub.s32 %v392, %v492
    %v494 = vrot.slane %v161, %v493
    %v495 = vsel %vm397, %v494, %v490
    %v496 = vlaneseq
    %v497 = vshrl.u32 %v496, 7
    %v498 = vsub.s32 %v399, %v497
    %v499 = vrot.slane %v164, %v498
    %v500 = vsel %vm404, %v499, %v495
    %v501 = vlaneseq
    %v502 = vshrl.u32 %v501, 7
    %v503 = vsub.s32 %v406, %v502
    %v504 = vrot.slane %v167, %v503
    %v505 = vsel %vm411, %v504, %v500
    %v506 = vlaneseq
    %v507 = vshrl.u32 %v506, 7
    %v508 = vsub.s32 %v413, %v507
    %v509 = vrot.slane %v170, %v508
    %v510 = vsel %vm418, %v509, %v505
    %v511 = vlaneseq
    %v512 = vshrl.u32 %v511, 7
    %v513 = vsub.s32 %v420, %v512
    %v514 = vrot.slane %v173, %v513
    %v515 = vsel %vm425, %v514, %v510
    %v516 = vlaneseq
    %v517 = vshrl.u32 %v516, 7
    %v518 = vsub.s32 %v427, %v517
    %v519 = vrot.slane %v176, %v518
    %v520 = vsel %vm432, %v519, %v515
    %v521 = vlaneseq
    %v522 = vshrl.u32 %v521, 7
    %v523 = vsub.s32 %v434, %v522
    %v524 = vrot.slane %v179, %v523
    %v525 = vsel %vm439, %v524, %v520
    %v526 = vlaneseq
    %v527 = vshrl.u32 %v526, 7
    %v528 = vsub.s32 %v441, %v527
    %v529 = vrot.slane %v182, %v528
    %v530 = vsel %vm446, %v529, %v525
    %v531 = vlaneseq
    %v532 = vshrl.u32 %v531, 7
    %v533 = vsub.s32 %v448, %v532
    %v534 = vrot.slane %v185, %v533
    %v535 = vsel %vm453, %v534, %v530
    %v536 = vlaneseq
    %v537 = vshrl.u32 %v536, 7
    %v538 = vsub.s32 %v455, %v537
    %v539 = vrot.slane %v188, %v538
    %v540 = vsel %vm460, %v539, %v535
    %v541 = vlaneseq
    %v542 = vshrl.u32 %v541, 7
    %v543 = vsub.s32 %v352, %v542
    %v544 = vrot.slane %v191, %v543
    %v545 = vlaneseq
    %v546 = vshrl.u32 %v545, 7
    %v547 = vsub.s32 %v357, %v546
    %v548 = vrot.slane %v194, %v547
    %v549 = vsel %vm362, %v548, %v544
    %v550 = vlaneseq
    %v551 = vshrl.u32 %v550, 7
    %v552 = vsub.s32 %v364, %v551
    %v553 = vrot.slane %v197, %v552
    %v554 = vsel %vm369, %v553, %v549
    %v555 = vlaneseq
    %v556 = vshrl.u32 %v555, 7
    %v557 = vsub.s32 %v371, %v556
    %v558 = vrot.slane %v200, %v557
    %v559 = vsel %vm376, %v558, %v554
    %v560 = vlaneseq
    %v561 = vshrl.u32 %v560, 7
    %v562 = vsub.s32 %v378, %v561
    %v563 = vrot.slane %v203, %v562
    %v564 = vsel %vm383, %v563, %v559
    %v565 = vlaneseq
    %v566 = vshrl.u32 %v565, 7
    %v567 = vsub.s32 %v385, %v566
    %v568 = vrot.slane %v206, %v567
    %v569 = vsel %vm390, %v568, %v564
    %v570 = vlaneseq
    %v571 = vshrl.u32 %v570, 7
    %v572 = vsub.s32 %v392, %v571
    %v573 = vrot.slane %v209, %v572
    %v574 = vsel %vm397, %v573, %v569
    %v575 = vlaneseq
    %v576 = vshrl.u32 %v575, 7
    %v577 = vsub.s32 %v399, %v576
    %v578 = vrot.slane %v212, %v577
    %v579 = vsel %vm404, %v578, %v574
    %v580 = vlaneseq
    %v581 = vshrl.u32 %v580, 7
    %v582 = vsub.s32 %v406, %v581
    %v583 = vrot.slane %v215, %v582
    %v584 = vsel %vm411, %v583, %v579
    %v585 = vlaneseq
    %v586 = vshrl.u32 %v585, 7
    %v587 = vsub.s32 %v413, %v586
    %v588 = vrot.slane %v218, %v587
    %v589 = vsel %vm418, %v588, %v584
    %v590 = vlaneseq
    %v591 = vshrl.u32 %v590, 7
    %v592 = vsub.s32 %v420, %v591
    %v593 = vrot.slane %v221, %v592
    %v594 = vsel %vm425, %v593, %v589
    %v595 = vlaneseq
    %v596 = vshrl.u32 %v595, 7
    %v597 = vsub.s32 %v427, %v596
    %v598 = vrot.slane %v224, %v597
    %v599 = vsel %vm432, %v598, %v594
    %v600 = vlaneseq
    %v601 = vshrl.u32 %v600, 7
    %v602 = vsub.s32 %v434, %v601
    %v603 = vrot.slane %v227, %v602
    %v604 = vsel %vm439, %v603, %v599
    %v605 = vlaneseq
    %v606 = vshrl.u32 %v605, 7
    %v607 = vsub.s32 %v441, %v606
    %v608 = vrot.slane %v230, %v607
    %v609 = vsel %vm446, %v608, %v604
    %v610 = vlaneseq
    %v611 = vshrl.u32 %v610, 7
    %v612 = vsub.s32 %v448, %v611
    %v613 = vrot.slane %v233, %v612
    %v614 = vsel %vm453, %v613, %v609
    %v615 = vlaneseq
    %v616 = vshrl.u32 %v615, 7
    %v617 = vsub.s32 %v455, %v616
    %v618 = vrot.slane %v236, %v617
    %v619 = vsel %vm460, %v618, %v614
    %v620 = vlaneseq
    %v621 = vshrl.u32 %v620, 7
    %v622 = vsub.s32 %v352, %v621
    %v623 = vrot.slane %v239, %v622
    %v624 = vlaneseq
    %v625 = vshrl.u32 %v624, 7
    %v626 = vsub.s32 %v357, %v625
    %v627 = vrot.slane %v242, %v626
    %v628 = vsel %vm362, %v627, %v623
    %v629 = vlaneseq
    %v630 = vshrl.u32 %v629, 7
    %v631 = vsub.s32 %v364, %v630
    %v632 = vrot.slane %v245, %v631
    %v633 = vsel %vm369, %v632, %v628
    %v634 = vlaneseq
    %v635 = vshrl.u32 %v634, 7
    %v636 = vsub.s32 %v371, %v635
    %v637 = vrot.slane %v248, %v636
    %v638 = vsel %vm376, %v637, %v633
    %v639 = vlaneseq
    %v640 = vshrl.u32 %v639, 7
    %v641 = vsub.s32 %v378, %v640
    %v642 = vrot.slane %v251, %v641
    %v643 = vsel %vm383, %v642, %v638
    %v644 = vlaneseq
    %v645 = vshrl.u32 %v644, 7
    %v646 = vsub.s32 %v385, %v645
    %v647 = vrot.slane %v254, %v646
    %v648 = vsel %vm390, %v647, %v643
    %v649 = vlaneseq
    %v650 = vshrl.u32 %v649, 7
    %v651 = vsub.s32 %v392, %v650
    %v652 = vrot.slane %v257, %v651
    %v653 = vsel %vm397, %v652, %v648
    %v654 = vlaneseq
    %v655 = vshrl.u32 %v654, 7
    %v656 = vsub.s32 %v399, %v655
    %v657 = vrot.slane %v260, %v656
    %v658 = vsel %vm404, %v657, %v653
    %v659 = vlaneseq
    %v660 = vshrl.u32 %v659, 7
    %v661 = vsub.s32 %v406, %v660
    %v662 = vrot.slane %v263, %v661
    %v663 = vsel %vm411, %v662, %v658
    %v664 = vlaneseq
    %v665 = vshrl.u32 %v664, 7
    %v666 = vsub.s32 %v413, %v665
    %v667 = vrot.slane %v266, %v666
    %v668 = vsel %vm418, %v667, %v663
    %v669 = vlaneseq
    %v670 = vshrl.u32 %v669, 7
    %v671 = vsub.s32 %v420, %v670
    %v672 = vrot.slane %v269, %v671
    %v673 = vsel %vm425, %v672, %v668
    %v674 = vlaneseq
    %v675 = vshrl.u32 %v674, 7
    %v676 = vsub.s32 %v427, %v675
    %v677 = vrot.slane %v272, %v676
    %v678 = vsel %vm432, %v677, %v673
    %v679 = vlaneseq
    %v680 = vshrl.u32 %v679, 7
    %v681 = vsub.s32 %v434, %v680
    %v682 = vrot.slane %v275, %v681
    %v683 = vsel %vm439, %v682, %v678
    %v684 = vlaneseq
    %v685 = vshrl.u32 %v684, 7
    %v686 = vsub.s32 %v441, %v685
    %v687 = vrot.slane %v278, %v686
    %v688 = vsel %vm446, %v687, %v683
    %v689 = vlaneseq
    %v690 = vshrl.u32 %v689, 7
    %v691 = vsub.s32 %v448, %v690
    %v692 = vrot.slane %v281, %v691
    %v693 = vsel %vm453, %v692, %v688
    %v694 = vlaneseq
    %v695 = vshrl.u32 %v694, 7
    %v696 = vsub.s32 %v455, %v695
    %v697 = vrot.slane %v284, %v696
    %v698 = vsel %vm460, %v697, %v693
    %vm699 = vcmask 1041409
    %v700 = vsel %vm699, %v619, %v461
    %v701 = vsel %vm699, %v698, %v540
    %v705 = vcombine.high %v286, %v286
    %707 = vmatprep.subr.mxu0 %v705
    %708 = vmatpush1.xpose.msra.mxu0 %v286
    %709 = vmatprep.subr.mxu0 0.0
    %710 = vmatpush1.xpose.msra.mxu0 0.0
    %711 = vmatprep.subr.mxu0 0.0
    %712 = vmatpush1.xpose.msra.mxu0 0.0
    %713 = vmatprep.subr.mxu0 0.0
    %714 = vmatpush1.xpose.msra.mxu0 0.0
    %715 = vmatprep.subr.mxu0 0.0
    %716 = vmatpush1.xpose.msra.mxu0 0.0
    %717 = vmatprep.subr.mxu0 0.0
    %718 = vmatpush1.xpose.msra.mxu0 0.0
    %719 = vmatprep.subr.mxu0 0.0
    %720 = vmatpush1.xpose.msra.mxu0 0.0
    %721 = vmatprep.subr.mxu0 0.0
    %722 = vmatpush1.xpose.msra.mxu0 0.0
    %723 = vmatprep.subr.mxu0 0.0
    %724 = vmatpush1.xpose.msra.mxu0 0.0
    %725 = vmatprep.subr.mxu0 0.0
    %726 = vmatpush1.xpose.msra.mxu0 0.0
    %727 = vmatprep.subr.mxu0 0.0
    %728 = vmatpush1.xpose.msra.mxu0 0.0
    %729 = vmatprep.subr.mxu0 0.0
    %730 = vmatpush1.xpose.msra.mxu0 0.0
    %731 = vmatprep.subr.mxu0 0.0
    %732 = vmatpush1.xpose.msra.mxu0 0.0
    %733 = vmatprep.subr.mxu0 0.0
    %734 = vmatpush1.xpose.msra.mxu0 0.0
    %735 = vmatprep.subr.mxu0 0.0
    %736 = vmatpush1.xpose.msra.mxu0 0.0
    %737 = vmatprep.subr.mxu0 0.0
    %738 = vmatpush1.xpose.msra.mxu0 0.0
    %739 = vmatprep.subr.mxu0 0.0
    %740 = vmatpush1.xpose.msra.mxu0 0.0
    %741 = vmatprep.subr.mxu0 0.0
    %742 = vmatpush1.xpose.msra.mxu0 0.0
    %743 = vmatprep.subr.mxu0 0.0
    %744 = vmatpush1.xpose.msra.mxu0 0.0
    %745 = vmatprep.subr.mxu0 0.0
    %746 = vmatpush1.xpose.msra.mxu0 0.0
    %747 = vmatprep.subr.mxu0 0.0
    %748 = vmatpush1.xpose.msra.mxu0 0.0
    %749 = vmatprep.subr.mxu0 0.0
    %750 = vmatpush1.xpose.msra.mxu0 0.0
    %751 = vmatprep.subr.mxu0 0.0
    %752 = vmatpush1.xpose.msra.mxu0 0.0
    %753 = vmatprep.subr.mxu0 0.0
    %754 = vmatpush1.xpose.msra.mxu0 0.0
    %755 = vmatprep.subr.mxu0 0.0
    %756 = vmatpush1.xpose.msra.mxu0 0.0
    %757 = vmatprep.subr.mxu0 0.0
    %758 = vmatpush1.xpose.msra.mxu0 0.0
    %759 = vmatprep.subr.mxu0 0.0
    %760 = vmatpush1.xpose.msra.mxu0 0.0
    %761 = vmatprep.subr.mxu0 0.0
    %762 = vmatpush1.xpose.msra.mxu0 0.0
    %763 = vmatprep.subr.mxu0 0.0
    %764 = vmatpush1.xpose.msra.mxu0 0.0
    %765 = vmatprep.subr.mxu0 0.0
    %766 = vmatpush1.xpose.msra.mxu0 0.0
    %767 = vmatprep.subr.mxu0 0.0
    %768 = vmatpush1.xpose.msra.mxu0 0.0
    %769 = vmatprep.subr.mxu0 0.0
    %770 = vmatpush1.xpose.msra.mxu0 0.0
    %771 = vmatprep.mubr.f32.mxu0 %v701
    %772 = vmatmul.mubr.f32.gmra.mrb[0].mxu0 %v700
    %v773 = vpop.f32.mrb[0].mxu0
    %v774 = vadd.f32 0.0, %v773
    %v775 = vpop.f32.mrb[0].mxu0
    %776 = vdwg.mxu0
    %v777 = vadd.f32 %v285, %v774
    %vm778 = vcmask 17408
    %779 = vst.msk [vmem:[#allocation2] sm:$0x3] %vm778, %v777
    // Predicated region
    $region18: #{tpu_custom_call.1} parent=1 // pred_check
      _
    $region19: #{tpu_custom_call.1} parent=1 // pred_check_branch
      %781 = sbr.rel (0) target = $region21
    $region20: #{tpu_custom_call.1} parent=1 // pred_region
      %s783 = ssub.s32 32, 32
      %784 = vsyncadd [#allocation3], %s783
      %s786 = sshll.u32 [#allocation2], 4
      %s787 = int_to_ptr.vmem [resolvable:$true] %s786
      %789 = dma.vmem_to_hbm [thread:$0]  %s787, 32, %s3, [#allocation3]
    $region21: #{tpu_custom_call.1} parent=1 // pred_fallthru
      _
    // Predicated region
    $region22: #{tpu_custom_call.1} parent=1 // pred_check
      _
    $region23: #{tpu_custom_call.1} parent=1 // pred_check_branch
      %791 = sbr.rel (0) target = $region25
    $region24: #{tpu_custom_call.1} parent=1 // pred_region
      %792 = dma.done [#allocation3], 32
    $region25: #{tpu_custom_call.1} parent=1 // pred_fallthru
      _
    %793 = vsyncpa [#allocation3], 1

</llo_original>
